<compile_context>
chip_gen: v7x
topology: tpu7x:2x2x1
jax: 0.10.0
libtpu: 0.0.40
codegen_flags: <defaults>
</compile_context>

<pallas_src>
import functools

import jax
import jax.numpy as jnp
from jax.experimental import pallas as pl
from jax.experimental.pallas import tpu as pltpu


# ---------------------------------------------------------------------------
# Tiling / VMEM budgeting
# ---------------------------------------------------------------------------

def _physical_vmem_bytes():
    """Per-core VMEM capacity; conservative fallback if the query is unavailable."""
    try:
        info = pltpu.get_tpu_info()
        for attr in ("vmem_capacity_bytes", "vmem_bytes", "vmem_size_bytes"):
            v = getattr(info, attr, None)
            if v:
                return int(v)
    except Exception:
        pass
    return 64 * 1024 * 1024  # v7x per-TensorCore VMEM (smallest across v5e/v6e/v7x)


def _pick_tiles(B, N, E, q_bytes, logit_bytes, key_buffers, vmem_budget):
    """Pick (tb, tn): MXU-shaped, lane-dense logits stores, VMEM-budgeted.

    Larger tb is preferred first: keys are streamed from HBM B // tb times, so
    doubling tb halves key traffic.  tn stays a multiple of 128 for unmasked
    lane-dense logits stores and efficient key DMAs.
    """
    tb_opts = [t for t in (1024, 512, 256, 128, 64, 32, 16, 8) if B % t == 0] or [B]
    tn_opts = [t for t in (1024, 512, 256, 128) if N % t == 0] or [N]

    def footprint(tb, tn):
        q = 2 * tb * E * q_bytes                 # double-buffered query tile
        k = key_buffers * tn * E * q_bytes       # key tiles (2- or 3-deep pipeline)
        o = 2 * tb * tn * logit_bytes            # double-buffered logits tile (0 if skipped)
        loss = 2 * tb * 4
        scratch = 3 * tb * 4
        return q + k + o + loss + scratch

    for tb in tb_opts:
        for tn in tn_opts:
            if footprint(tb, tn) <= vmem_budget:
                return tb, tn, footprint(tb, tn)
    tb, tn = tb_opts[-1], tn_opts[-1]
    return tb, tn, footprint(tb, tn)


# ---------------------------------------------------------------------------
# Kernel
# ---------------------------------------------------------------------------

def _clip_logits_ce_kernel(scale_ref, q_ref, k_ref, *refs,
                           return_logits, exp_dtype):
    if return_logits:
        logits_ref, loss_ref, m_sc, l_sc, d_sc = refs
    else:
        loss_ref, m_sc, l_sc, d_sc = refs

    i = pl.program_id(1)          # row tile index
    j = pl.program_id(2)          # column tile index (reduction axis, innermost)

    @pl.when(j == 0)
    def _():
        m_sc[...] = jnp.full_like(m_sc, -jnp.inf)
        l_sc[...] = jnp.zeros_like(l_sc)
        d_sc[...] = jnp.zeros_like(d_sc)

    # NT matmul on the MXU: (tb, E) x (tn, E) contracting last dims -> (tb, tn),
    # compute_dtype operands, f32 accumulation.  No materialized transpose.
    acc = jax.lax.dot_general(
        q_ref[...], k_ref[...],
        dimension_numbers=(((1,), (1,)), ((), ())),
        preferred_element_type=jnp.float32)
    s = scale_ref[0] * acc                       # scalar from SMEM

    if return_logits:
        logits_ref[...] = s.astype(logits_ref.dtype)

    tb, tn = s.shape
    row_lo = i * tb
    col_lo = j * tn

    # Cross-entropy target for row r is column r (labels = arange(B)).  The
    # diagonal intersects this tile only if the row/column ranges overlap; in
    # that case use one full (tb, tn) iota and a (tb, 1) per-row target column.
    @pl.when(jnp.logical_and(row_lo < col_lo + tn, col_lo < row_lo + tb))
    def _():
        col_ids = jax.lax.broadcasted_iota(jnp.int32, (tb, tn), 1)
        tgt_col = (row_lo - col_lo) + jax.lax.broadcasted_iota(jnp.int32, (tb, 1), 0)
        d_sc[...] += jnp.sum(jnp.where(col_ids == tgt_col, s, 0.0),
                             axis=-1, keepdims=True)

    # Online log-sum-exp across column tiles.  exp in exp_dtype (bf16 -> bf16
    # EUP on v6e/v7x, ~2x), accumulation always f32.
    m_prev = m_sc[...]
    m_new = jnp.maximum(m_prev, jnp.max(s, axis=-1, keepdims=True))
    p = jnp.exp((s - m_new).astype(exp_dtype)).astype(jnp.float32)
    l_sc[...] = (l_sc[...] * jnp.exp(m_prev - m_new)
                 + jnp.sum(p, axis=-1, keepdims=True))
    m_sc[...] = m_new

    @pl.when(j == pl.num_programs(2) - 1)
    def _():
        # per-row CE loss: logsumexp(logits[r, :]) - logits[r, r]
        loss_ref[...] = m_sc[...] + jnp.log(l_sc[...]) - d_sc[...]


# ---------------------------------------------------------------------------
# Wrapper
# ---------------------------------------------------------------------------

def clip_logits_and_ce(features, keys, logit_scale, *,
                       compute_dtype=jnp.bfloat16,
                       logits_dtype=jnp.float32,
                       return_logits=True,
                       exp_dtype=None,
                       key_buffers=2):
    """features: (2, B, E), keys: (2, N, E).

    Returns (logits (2, B, N) logits_dtype or None, per-row CE loss (2, B, 1) f32)
    where logits[d] = logit_scale * features[d] @ keys[d].T and CE targets are
    arange(B).  Matmul operands are cast to compute_dtype (f32 MXU accumulation).
    """
    D, B, E = features.shape
    D2, N, E2 = keys.shape
    assert D == 2 and D2 == 2 and E == E2
    assert B <= N, "diagonal CE targets require B <= N"

    if exp_dtype is None:
        exp_dtype = compute_dtype

    q_bytes = jnp.dtype(compute_dtype).itemsize
    logit_bytes = jnp.dtype(logits_dtype).itemsize if return_logits else 0

    # Per-generation VMEM budget (~45% of physical for the pipelined working
    # set: ~57 MiB on v5e/v6e, ~28 MiB on v7x), plus an explicit scoped limit.
    vmem_cap = _physical_vmem_bytes()
    vmem_budget = int(vmem_cap * 0.45)
    tb, tn, fp = _pick_tiles(B, N, E, q_bytes, logit_bytes, key_buffers, vmem_budget)
    assert B % tb == 0 and N % tn == 0
    vmem_limit = int(min(vmem_cap, max(fp + (8 << 20), 32 << 20)))

    q = features.astype(compute_dtype)
    k = keys.astype(compute_dtype)
    scale = jnp.asarray(logit_scale, jnp.float32).reshape(1)

    key_spec_kwargs = {}
    if key_buffers != 2:
        # Optional deeper pipelining on the keys (sweep if DMA is exposed).
        key_spec_kwargs["pipeline_mode"] = pl.Buffered(key_buffers)

    out_shape = [jax.ShapeDtypeStruct((D, B, 1), jnp.float32)]
    out_specs = [pl.BlockSpec((None, tb, 1), lambda d, i, j: (d, i, 0))]
    if return_logits:
        out_shape = [jax.ShapeDtypeStruct((D, B, N), logits_dtype)] + out_shape
        out_specs = [pl.BlockSpec((None, tb, tn), lambda d, i, j: (d, i, j))] + out_specs

    kernel = functools.partial(_clip_logits_ce_kernel,
                               return_logits=return_logits,
                               exp_dtype=exp_dtype)

    outs = pl.pallas_call(
        kernel,
        out_shape=tuple(out_shape),
        grid_spec=pltpu.PrefetchScalarGridSpec(
            num_scalar_prefetch=0,
            grid=(D, B // tb, N // tn),
            in_specs=[
                # scalar logit_scale -> SMEM (scalar-slot read, no vreg padding)
                pl.BlockSpec(memory_space=pltpu.MemorySpace.SMEM),
                pl.BlockSpec((None, tb, E), lambda d, i, j: (d, i, 0)),   # queries
                pl.BlockSpec((None, tn, E), lambda d, i, j: (d, j, 0),
                             **key_spec_kwargs),                          # key rows
            ],
            out_specs=out_specs,
            scratch_shapes=[pltpu.VMEM((tb, 1), jnp.float32),   # running max
                            pltpu.VMEM((tb, 1), jnp.float32),   # running sumexp
                            pltpu.VMEM((tb, 1), jnp.float32)],  # diagonal logit
        ),
        compiler_params=pltpu.CompilerParams(
            # Leading D axis "parallel": one direction per TensorCore on v7x.
            dimension_semantics=("parallel", "parallel", "arbitrary"),
            vmem_limit_bytes=vmem_limit),
    )(scale, q, k)

    if return_logits:
        logits, loss = outs
    else:
        logits, loss = None, outs[0]
    return logits, loss


def _clip_logits_and_ce_xla(features, keys, logit_scale):
    """Plain-XLA fallback (f32) for small problems where the kernel is pure overhead."""
    logits = logit_scale * jnp.einsum(
        "dbe,dne->dbn", features.astype(jnp.float32), keys.astype(jnp.float32))
    B = features.shape[1]
    lse = jax.scipy.special.logsumexp(logits, axis=-1, keepdims=True)
    diag = jnp.take_along_axis(logits, jnp.arange(B).reshape(1, B, 1), axis=-1)
    return logits, lse - diag


# ---------------------------------------------------------------------------
# Module port
# ---------------------------------------------------------------------------

class ClipMomentumMemoryBankLoss:
    """JAX/Pallas port of the PyTorch module (forward / compute_loss / _update)."""

    def __init__(self, embed_size=128, size=248, half_precision=False, seed=0,
                 world_size=1, compute_dtype=jnp.bfloat16):
        assert size > 0
        self.world_size = world_size
        self.size = size
        self.embed_size = embed_size
        self.compute_dtype = compute_dtype
        dtype = jnp.float16 if half_precision else jnp.float32
        k1, k2 = jax.random.split(jax.random.PRNGKey(seed))
        imb = jax.random.uniform(k1, (size, embed_size), dtype=jnp.float32)
        imb = imb / jnp.linalg.norm(imb, axis=-1, keepdims=True)
        tmb = jax.random.uniform(k2, (size, embed_size), dtype=jnp.float32)
        tmb = tmb / jnp.linalg.norm(tmb, axis=-1, keepdims=True)
        self.image_memory_bank = imb.astype(dtype)
        self.text_memory_bank = tmb.astype(dtype)
        # compute_dtype (bf16) copies so the per-step key build is a single
        # fused concat/stack pass with no extra f32->bf16 HBM pass.
        self._image_bank_c = self.image_memory_bank.astype(compute_dtype)
        self._text_bank_c = self.text_memory_bank.astype(compute_dtype)
        self.index_pointer = 0

    def _update(self, img_emb, text_emb):
        # TODO(synk): world_size > 1 gather_features (cross-device all-gather) not ported.
        bsz = img_emb.shape[0]
        assert bsz == text_emb.shape[0]
        assert self.size % bsz == 0
        ptr = self.index_pointer
        self.image_memory_bank = jax.lax.dynamic_update_slice(
            self.image_memory_bank, img_emb.astype(self.image_memory_bank.dtype), (ptr, 0))
        self.text_memory_bank = jax.lax.dynamic_update_slice(
            self.text_memory_bank, text_emb.astype(self.text_memory_bank.dtype), (ptr, 0))
        self._image_bank_c = jax.lax.dynamic_update_slice(
            self._image_bank_c, img_emb.astype(self.compute_dtype), (ptr, 0))
        self._text_bank_c = jax.lax.dynamic_update_slice(
            self._text_bank_c, text_emb.astype(self.compute_dtype), (ptr, 0))
        self.index_pointer = (ptr + bsz) % self.size

    def forward(self, image_features, text_features,
                image_features_m, text_features_m, logit_scale,
                use_pallas=None, return_logits=True):
        # NOTE: like the PyTorch module, forward() does NOT call _update();
        # the memory bank is advanced explicitly by the caller.
        return self.compute_loss(image_features, text_features,
                                 image_features_m, text_features_m, logit_scale,
                                 use_pallas=use_pallas, return_logits=return_logits)

    def compute_loss(self, image_features, text_features,
                     image_features_m, text_features_m, logit_scale,
                     use_pallas=None, return_logits=True):
        B = image_features.shape[0]
        N = B + self.size
        if use_pallas is None:
            # At small B*N the kernel is pure launch/pipeline overhead; let XLA do it.
            use_pallas = (B * N) >= (1 << 20)

        if use_pallas:
            cd = self.compute_dtype
            # Single fused (cast+concat+stack) pass over the key set; banks are
            # already stored in compute_dtype, features_m casts are tiny (B, E).
            # TODO(synk): keep a persistent preallocated (2, N, E) key buffer updated
            # in-place (dynamic_update_slice + input_output_aliases) to avoid even
            # this one copy per step.
            keys = jnp.stack(
                [jnp.concatenate([text_features_m.astype(cd), self._text_bank_c], axis=0),
                 jnp.concatenate([image_features_m.astype(cd), self._image_bank_c], axis=0)],
                axis=0)
            feats = jnp.stack([image_features, text_features], axis=0).astype(cd)
            logits, loss_rows = clip_logits_and_ce(
                feats, keys, logit_scale, compute_dtype=cd,
                return_logits=return_logits)
        else:
            feats = jnp.stack([image_features, text_features], axis=0)
            keys = jnp.stack(
                [jnp.concatenate([text_features_m,
                                  self.text_memory_bank.astype(text_features_m.dtype)], 0),
                 jnp.concatenate([image_features_m,
                                  self.image_memory_bank.astype(image_features_m.dtype)], 0)],
                axis=0)
            logits, loss_rows = _clip_logits_and_ce_xla(feats, keys, logit_scale)
            if not return_logits:
                logits = None

        itc_loss = 0.5 * (jnp.mean(loss_rows[0]) + jnp.mean(loss_rows[1]))
        labels = jnp.arange(B, dtype=jnp.int32)
        out = {"loss": itc_loss, "targets": labels}
        if logits is not None:
            out["logits_per_image"] = logits[0]
            out["logits_per_text"] = logits[1]
        return out


# ---------------------------------------------------------------------------
# Reference + demo
# ---------------------------------------------------------------------------

def _reference(module, img, txt, img_m, txt_m, scale, dtype=jnp.float32):
    """Pure-JAX reference matching the PyTorch module; `dtype` = matmul operand dtype."""
    tk = jnp.concatenate([txt_m, module.text_memory_bank], axis=0)
    ik = jnp.concatenate([img_m, module.image_memory_bank], axis=0)
    lpi = scale * jnp.dot(img.astype(dtype), tk.astype(dtype).T,
                          preferred_element_type=jnp.float32)
    lpt = scale * jnp.dot(txt.astype(dtype), ik.astype(dtype).T,
                          preferred_element_type=jnp.float32)
    labels = jnp.arange(img.shape[0])

    def ce(logits):
        lse = jax.scipy.special.logsumexp(logits, axis=-1)
        return jnp.mean(lse - logits[jnp.arange(logits.shape[0]), labels])

    return (ce(lpi) + ce(lpt)) / 2, lpi, lpt


if __name__ == "__main__":
    B, E, SIZE = 8, 128, 248          # N = B + SIZE = 256 (small demo shapes)
    key = jax.random.PRNGKey(0)
    k1, k2, k3, k4 = jax.random.split(key, 4)

    def norm_feat(k):
        x = jax.random.normal(k, (B, E), dtype=jnp.float32)
        return x / jnp.linalg.norm(x, axis=-1, keepdims=True)

    image_features = norm_feat(k1)
    text_features = norm_feat(k2)
    image_features_m = norm_feat(k3)
    text_features_m = norm_feat(k4)
    logit_scale = jnp.float32(20.0)

    module = ClipMomentumMemoryBankLoss(embed_size=E, size=SIZE, seed=0)

    # --- Pallas path (forced: auto-dispatch would route these tiny shapes to XLA).
    out = module.forward(image_features, text_features,
                         image_features_m, text_features_m, logit_scale,
                         use_pallas=True)
    jax.block_until_ready(out)

    # Check against a reference using the same bf16-operand / f32-accumulate matmul.
    ref_loss_bf, ref_lpi_bf, ref_lpt_bf = _reference(
        module, image_features, text_features,
        image_features_m, text_features_m, logit_scale, dtype=jnp.bfloat16)
    assert jnp.allclose(out["logits_per_image"], ref_lpi_bf, atol=5e-3, rtol=1e-3)
    assert jnp.allclose(out["logits_per_text"], ref_lpt_bf, atol=5e-3, rtol=1e-3)
    assert jnp.allclose(out["loss"], ref_loss_bf, atol=1.5e-2)   # bf16 exp in LSE

    # Loose check against pure-f32 module semantics (bf16 rounding only).
    ref_loss_32, ref_lpi_32, ref_lpt_32 = _reference(
        module, image_features, text_features,
        image_features_m, text_features_m, logit_scale, dtype=jnp.float32)
    assert jnp.allclose(out["logits_per_image"], ref_lpi_32, atol=0.2)
    assert jnp.allclose(out["logits_per_text"], ref_lpt_32, atol=0.2)
    assert jnp.allclose(out["loss"], ref_loss_32, atol=0.25)
    assert jnp.array_equal(out["targets"], jnp.arange(B, dtype=jnp.int32))

    # --- Loss-only kernel path: skips the (2, B, N) logits writeback entirely.
    feats = jnp.stack([image_features, text_features], 0)
    keys = jnp.stack(
        [jnp.concatenate([text_features_m, module.text_memory_bank], 0),
         jnp.concatenate([image_features_m, module.image_memory_bank], 0)], 0)
    no_logits, loss_rows = clip_logits_and_ce(feats, keys, logit_scale,
                                              return_logits=False)
    jax.block_until_ready(loss_rows)
    loss_only = 0.5 * (jnp.mean(loss_rows[0]) + jnp.mean(loss_rows[1]))
    assert no_logits is None
    assert jnp.allclose(loss_only, out["loss"], atol=1e-5)

    # --- Exact-parity kernel path: f32 matmul operands and f32 exp.
    lg32, lr32 = clip_logits_and_ce(feats, keys, logit_scale,
                                    compute_dtype=jnp.float32)
    jax.block_until_ready(lg32)
    assert jnp.allclose(lg32[0], ref_lpi_32, atol=5e-4)
    assert jnp.allclose(lg32[1], ref_lpt_32, atol=5e-4)
    loss32 = 0.5 * (jnp.mean(lr32[0]) + jnp.mean(lr32[1]))
    assert jnp.allclose(loss32, ref_loss_32, atol=1e-3)

    # --- Auto-dispatch at these tiny shapes uses the XLA fallback; same semantics.
    out_auto = module.forward(image_features, text_features,
                              image_features_m, text_features_m, logit_scale)
    jax.block_until_ready(out_auto)
    assert jnp.allclose(out_auto["loss"], ref_loss_32, atol=1e-3)

    print("KERNEL_OK")
</pallas_src>

<mosaic_0001>
module attributes {stable_mosaic.version = 11 : i64} {
  func.func @_clip_logits_ce_kernel(%arg0: i32, %arg1: i32, %arg2: i32, %arg3: memref<1xf32, #tpu.memory_space<smem>>, %arg4: memref<1x8x128xbf16, #tpu.memory_space<vmem>>, %arg5: memref<1x256x128xbf16, #tpu.memory_space<vmem>>, %arg6: memref<1x8x256xf32, #tpu.memory_space<vmem>>, %arg7: memref<1x8x1xf32, #tpu.memory_space<vmem>>, %arg8: memref<8x1xf32, #tpu.memory_space<vmem>>, %arg9: memref<8x1xf32, #tpu.memory_space<vmem>>, %arg10: memref<8x1xf32, #tpu.memory_space<vmem>>) attributes {dimension_semantics = [#tpu.dimension_semantics<parallel>, #tpu.dimension_semantics<parallel>, #tpu.dimension_semantics<arbitrary>], iteration_bounds = array<i64: 2, 1, 1>, scalar_prefetch = 0 : i64, scratch_operands = 3 : i64, tpu.core_type = #tpu.core_type<tc>, window_params = [{transform_indices = @transform_0, window_bounds = array<i64: 1>}, {transform_indices = @transform_1, window_bounds = array<i64: 1, 8, 128>}, {transform_indices = @transform_2, window_bounds = array<i64: 1, 256, 128>}, {transform_indices = @transform_3, window_bounds = array<i64: 1, 8, 256>}, {transform_indices = @transform_4, window_bounds = array<i64: 1, 8, 1>}]} {
    %c0_i32 = arith.constant 0 : i32
    %0 = arith.cmpi eq, %arg2, %c0_i32 : i32
    %1 = arith.extui %0 : i1 to i32
    %c0_i32_0 = arith.constant 0 : i32
    %2 = arith.cmpi ne, %1, %c0_i32_0 : i32
    scf.if %2 {
      %cst_25 = arith.constant 0xFF800000 : f32
      %44 = vector.broadcast %cst_25 : f32 to vector<8x1xf32>
      %c0_26 = arith.constant 0 : index
      %c0_27 = arith.constant 0 : index
      %45 = vector.load %arg8[%c0_26, %c0_27] : memref<8x1xf32, #tpu.memory_space<vmem>>, vector<8x1xf32>
      tpu.vector_store %arg8[%c0_26, %c0_27], %44 {strides = array<i32>} : memref<8x1xf32, #tpu.memory_space<vmem>>, vector<8x1xf32>,
      %cst_28 = arith.constant 0.000000e+00 : f32
      %46 = vector.broadcast %cst_28 : f32 to vector<8x1xf32>
      %c0_29 = arith.constant 0 : index
      %c0_30 = arith.constant 0 : index
      %47 = vector.load %arg9[%c0_29, %c0_30] : memref<8x1xf32, #tpu.memory_space<vmem>>, vector<8x1xf32>
      tpu.vector_store %arg9[%c0_29, %c0_30], %46 {strides = array<i32>} : memref<8x1xf32, #tpu.memory_space<vmem>>, vector<8x1xf32>,
      %cst_31 = arith.constant 0.000000e+00 : f32
      %48 = vector.broadcast %cst_31 : f32 to vector<8x1xf32>
      %c0_32 = arith.constant 0 : index
      %c0_33 = arith.constant 0 : index
      %49 = vector.load %arg10[%c0_32, %c0_33] : memref<8x1xf32, #tpu.memory_space<vmem>>, vector<8x1xf32>
      tpu.vector_store %arg10[%c0_32, %c0_33], %48 {strides = array<i32>} : memref<8x1xf32, #tpu.memory_space<vmem>>, vector<8x1xf32>,
    } else {
    }
    %c0 = arith.constant 0 : index
    %c0_1 = arith.constant 0 : index
    %c0_2 = arith.constant 0 : index
    %3 = vector.load %arg4[%c0, %c0_1, %c0_2] : memref<1x8x128xbf16, #tpu.memory_space<vmem>>, vector<1x8x128xbf16>
    %4 = vector.shape_cast %3 : vector<1x8x128xbf16> to vector<8x128xbf16>
    %c0_3 = arith.constant 0 : index
    %c0_4 = arith.constant 0 : index
    %c0_5 = arith.constant 0 : index
    %5 = vector.load %arg5[%c0_3, %c0_4, %c0_5] : memref<1x256x128xbf16, #tpu.memory_space<vmem>>, vector<1x256x128xbf16>
    %6 = vector.shape_cast %5 : vector<1x256x128xbf16> to vector<256x128xbf16>
    %cst = arith.constant dense<0.000000e+00> : vector<8x256xf32>
    %7 = tpu.matmul %4, %6, %cst {dimension_numbers = #tpu.dot_dimension_numbers<[1], [1], [0], [0], [0, 0, 1, 0], [], []>} : vector<8x128xbf16>, vector<256x128xbf16>, vector<8x256xf32> -> vector<8x256xf32>
    %c0_6 = arith.constant 0 : index
    %8 = memref.load %arg3[%c0_6] : memref<1xf32, #tpu.memory_space<smem>>
    %9 = vector.broadcast %8 : f32 to vector<8x256xf32>
    %10 = arith.mulf %9, %7 : vector<8x256xf32>
    %c0_7 = arith.constant 0 : index
    %c0_8 = arith.constant 0 : index
    %c0_9 = arith.constant 0 : index
    %11 = vector.load %arg6[%c0_7, %c0_8, %c0_9] : memref<1x8x256xf32, #tpu.memory_space<vmem>>, vector<1x8x256xf32>
    %12 = vector.shape_cast %11 : vector<1x8x256xf32> to vector<8x256xf32>
    %13 = vector.shape_cast %10 : vector<8x256xf32> to vector<1x8x256xf32>
    tpu.vector_store %arg6[%c0_7, %c0_8, %c0_9], %13 {strides = array<i32>} : memref<1x8x256xf32, #tpu.memory_space<vmem>>, vector<1x8x256xf32>,
    %c8_i32 = arith.constant 8 : i32
    %14 = arith.muli %arg1, %c8_i32 : i32
    %c256_i32 = arith.constant 256 : i32
    %15 = arith.muli %arg2, %c256_i32 : i32
    %c256_i32_10 = arith.constant 256 : i32
    %16 = arith.addi %15, %c256_i32_10 : i32
    %17 = arith.cmpi slt, %14, %16 : i32
    %c8_i32_11 = arith.constant 8 : i32
    %18 = arith.addi %14, %c8_i32_11 : i32
    %19 = arith.cmpi slt, %15, %18 : i32
    %20 = arith.andi %17, %19 : i1
    %21 = arith.extui %20 : i1 to i32
    %c0_i32_12 = arith.constant 0 : i32
    %22 = arith.cmpi ne, %21, %c0_i32_12 : i32
    scf.if %22 {
      %44 = tpu.iota {dimensions = array<i32: 1>} : vector<8x256xi32>
      %45 = arith.subi %14, %15 : i32
      %46 = tpu.iota {dimensions = array<i32: 0>} : vector<8x1xi32>
      %47 = vector.broadcast %45 : i32 to vector<8x1xi32>
      %48 = arith.addi %47, %46 : vector<8x1xi32>
      %c0_25 = arith.constant 0 : index
      %c0_26 = arith.constant 0 : index
      %49 = vector.load %arg10[%c0_25, %c0_26] : memref<8x1xf32, #tpu.memory_space<vmem>>, vector<8x1xf32>
      %50 = vector.broadcast %48 : vector<8x1xi32> to vector<8x256xi32>
      %51 = arith.cmpi eq, %44, %50 : vector<8x256xi32>
      %cst_27 = arith.constant 0.000000e+00 : f32
      %52 = vector.broadcast %cst_27 : f32 to vector<8x256xf32>
      %53 = arith.select %51, %10, %52 : vector<8x256xi1>, vector<8x256xf32>
      %cst_28 = arith.constant dense<0.000000e+00> : vector<8xf32>
      %54 = vector.multi_reduction <add>, %53, %cst_28 [1] : vector<8x256xf32> to vector<8xf32>
      %55 = vector.shape_cast %54 : vector<8xf32> to vector<8x1xf32>
      %56 = arith.addf %49, %55 : vector<8x1xf32>
      %c0_29 = arith.constant 0 : index
      %c0_30 = arith.constant 0 : index
      %57 = vector.load %arg10[%c0_29, %c0_30] : memref<8x1xf32, #tpu.memory_space<vmem>>, vector<8x1xf32>
      tpu.vector_store %arg10[%c0_29, %c0_30], %56 {strides = array<i32>} : memref<8x1xf32, #tpu.memory_space<vmem>>, vector<8x1xf32>,
    } else {
    }
    %c0_13 = arith.constant 0 : index
    %c0_14 = arith.constant 0 : index
    %23 = vector.load %arg8[%c0_13, %c0_14] : memref<8x1xf32, #tpu.memory_space<vmem>>, vector<8x1xf32>
    %cst_15 = arith.constant dense<0xFF800000> : vector<8xf32>
    %24 = vector.multi_reduction <maximumf>, %10, %cst_15 [1] : vector<8x256xf32> to vector<8xf32>
    %25 = vector.shape_cast %24 : vector<8xf32> to vector<8x1xf32>
    %26 = arith.maximumf %23, %25 : vector<8x1xf32>
    %27 = vector.broadcast %26 : vector<8x1xf32> to vector<8x256xf32>
    %28 = arith.subf %10, %27 : vector<8x256xf32>
    %29 = arith.truncf %28 : vector<8x256xf32> to vector<8x256xbf16>
    %30 = math.exp %29 : vector<8x256xbf16>
    %31 = arith.extf %30 : vector<8x256xbf16> to vector<8x256xf32>
    %c0_16 = arith.constant 0 : index
    %c0_17 = arith.constant 0 : index
    %32 = vector.load %arg9[%c0_16, %c0_17] : memref<8x1xf32, #tpu.memory_space<vmem>>, vector<8x1xf32>
    %33 = arith.subf %23, %26 : vector<8x1xf32>
    %34 = math.exp %33 : vector<8x1xf32>
    %35 = arith.mulf %32, %34 : vector<8x1xf32>
    %cst_18 = arith.constant dense<0.000000e+00> : vector<8xf32>
    %36 = vector.multi_reduction <add>, %31, %cst_18 [1] : vector<8x256xf32> to vector<8xf32>
    %37 = vector.shape_cast %36 : vector<8xf32> to vector<8x1xf32>
    %38 = arith.addf %35, %37 : vector<8x1xf32>
    %c0_19 = arith.constant 0 : index
    %c0_20 = arith.constant 0 : index
    %39 = vector.load %arg9[%c0_19, %c0_20] : memref<8x1xf32, #tpu.memory_space<vmem>>, vector<8x1xf32>
    tpu.vector_store %arg9[%c0_19, %c0_20], %38 {strides = array<i32>} : memref<8x1xf32, #tpu.memory_space<vmem>>, vector<8x1xf32>,
    %c0_21 = arith.constant 0 : index
    %c0_22 = arith.constant 0 : index
    %40 = vector.load %arg8[%c0_21, %c0_22] : memref<8x1xf32, #tpu.memory_space<vmem>>, vector<8x1xf32>
    tpu.vector_store %arg8[%c0_21, %c0_22], %26 {strides = array<i32>} : memref<8x1xf32, #tpu.memory_space<vmem>>, vector<8x1xf32>,
    %c0_i32_23 = arith.constant 0 : i32
    %41 = arith.cmpi eq, %arg2, %c0_i32_23 : i32
    %42 = arith.extui %41 : i1 to i32
    %c0_i32_24 = arith.constant 0 : i32
    %43 = arith.cmpi ne, %42, %c0_i32_24 : i32
    scf.if %43 {
      %c0_25 = arith.constant 0 : index
      %c0_26 = arith.constant 0 : index
      %44 = vector.load %arg8[%c0_25, %c0_26] : memref<8x1xf32, #tpu.memory_space<vmem>>, vector<8x1xf32>
      %c0_27 = arith.constant 0 : index
      %c0_28 = arith.constant 0 : index
      %45 = vector.load %arg9[%c0_27, %c0_28] : memref<8x1xf32, #tpu.memory_space<vmem>>, vector<8x1xf32>
      %46 = math.log %45 : vector<8x1xf32>
      %47 = arith.addf %44, %46 : vector<8x1xf32>
      %c0_29 = arith.constant 0 : index
      %c0_30 = arith.constant 0 : index
      %48 = vector.load %arg10[%c0_29, %c0_30] : memref<8x1xf32, #tpu.memory_space<vmem>>, vector<8x1xf32>
      %49 = arith.subf %47, %48 : vector<8x1xf32>
      %c0_31 = arith.constant 0 : index
      %c0_32 = arith.constant 0 : index
      %c0_33 = arith.constant 0 : index
      %50 = vector.load %arg7[%c0_31, %c0_32, %c0_33] : memref<1x8x1xf32, #tpu.memory_space<vmem>>, vector<1x8x1xf32>
      %51 = vector.shape_cast %50 : vector<1x8x1xf32> to vector<8x1xf32>
      %52 = vector.shape_cast %49 : vector<8x1xf32> to vector<1x8x1xf32>
      tpu.vector_store %arg7[%c0_31, %c0_32, %c0_33], %52 {strides = array<i32>} : memref<1x8x1xf32, #tpu.memory_space<vmem>>, vector<1x8x1xf32>,
    } else {
    }
    return
  }
  func.func @transform_0(%arg0: i32, %arg1: i32, %arg2: i32) -> i32 {
    %c0_i32 = arith.constant 0 : i32
    %c0_i32_0 = arith.constant 0 : i32
    return %c0_i32 : i32
  }
  func.func @transform_1(%arg0: i32, %arg1: i32, %arg2: i32) -> (i32, i32, i32) {
    %c0_i32 = arith.constant 0 : i32
    %c0_i32_0 = arith.constant 0 : i32
    return %arg0, %arg1, %c0_i32 : i32, i32, i32
  }
  func.func @transform_2(%arg0: i32, %arg1: i32, %arg2: i32) -> (i32, i32, i32) {
    %c0_i32 = arith.constant 0 : i32
    %c0_i32_0 = arith.constant 0 : i32
    return %arg0, %arg2, %c0_i32 : i32, i32, i32
  }
  func.func @transform_3(%arg0: i32, %arg1: i32, %arg2: i32) -> (i32, i32, i32) {
    %c0_i32 = arith.constant 0 : i32
    return %arg0, %arg1, %arg2 : i32, i32, i32
  }
  func.func @transform_4(%arg0: i32, %arg1: i32, %arg2: i32) -> (i32, i32, i32) {
    %c0_i32 = arith.constant 0 : i32
    %c0_i32_0 = arith.constant 0 : i32
    return %arg0, %arg1, %c0_i32 : i32, i32, i32
  }
}

</mosaic_0001>

<llo_original>
// kernel: tpu_custom_call.1
$region0: #{tpu_custom_call.1}
  #allocation0 [shape = 'u32[]', space=smem, size = 0x4, offset = 0x4, fixed_abs, tag = 'smem constant byte address 0x4 - core index']
  #allocation1 [shape = 'u32[144,128]{1,0:T(1,128)}', space=vmem, size = 0x12000, scoped, tag = 'internal scratch']
  #allocation2 [shape = 'f32[8,1]{1,0:T(8,128)}', space=vmem, size = 0x1000, scoped, tag = 'scratch operand']
  #allocation3 [shape = 'f32[8,1]{1,0:T(8,128)}', space=vmem, size = 0x1000, scoped, tag = 'scratch operand']
  #allocation4 [shape = 'f32[8,1]{1,0:T(8,128)}', space=vmem, size = 0x1000, scoped, tag = 'scratch operand']
  #allocation5 [shape = 'f32[1]{0:T(128)S(6)}', space=smem, size = 0x200, scoped, tag = 'scoped memory for tpu_custom_call.1']
  %s0 = inlined_call_operand.<no memory space> [shape: f32[1], index: 0, kind: input, shape index: {}]
  %s1 = inlined_call_operand.hbm [shape: bf16[2,8,128], index: 1, kind: input, shape index: {}]
  %s2 = inlined_call_operand.hbm [shape: bf16[2,256,128], index: 2, kind: input, shape index: {}]
  %s3 = inlined_call_operand.hbm [shape: f32[2,8,256], index: 3, kind: output, shape index: {0}]
  %s4 = inlined_call_operand.vmem [shape: f32[2,8,1], index: 4, kind: output, shape index: {1}]
  %5 = xla_tuple %s3, %s4
  %s6 = sld [smem:[#allocation0]]
  $region73: #{tpu_custom_call.1} parent=0
    _
  %s8 = ssub.s32 1, %s6
  %s9 = scalar_select 0, %s8, %s6
  %10 = sst [smem:[#allocation5]] %s0
  $region1: #{tpu_custom_call.1} parent=0
    #allocation6 [shape = 'u8[4096]{0}', space=vmem, size = 0x1000, scoped, tag = 'input window, operand 1']
    #allocation7 [shape = 's32[2]{0}', space=sflag, size = 0x8, scoped, tag = 'scoped memory for tpu_custom_call.1']
    #allocation8 [shape = 's32[2]{0}', space=sflag, size = 0x8, scoped, tag = 'scoped memory for tpu_custom_call.1']
    #allocation9 [shape = 'u8[131072]{0}', space=vmem, size = 0x20000, scoped, tag = 'input window, operand 2']
    #allocation10 [shape = 's32[2]{0}', space=sflag, size = 0x8, scoped, tag = 'scoped memory for tpu_custom_call.1']
    #allocation11 [shape = 'u8[16384]{0}', space=vmem, size = 0x4000, scoped, tag = 'output window, operand 0']
    %11 = vsyncpa [#allocation7], 0
    %s12 = scalar_lea.sflag [#allocation7], 1
    %13 = vsyncpa %s12, 0
    %14 = vsyncpa [#allocation10], 0
    %s15 = scalar_lea.sflag [#allocation10], 1
    %16 = vsyncpa %s15, 0
    %17 = vsyncpa [#allocation8], 0
    %s18 = scalar_lea.sflag [#allocation8], 1
    %19 = vsyncpa %s18, 0
    loop: start=0, step=1, limit=4
    $region2: #{tpu_custom_call.1} parent=1 // loop_pre_header
      _
    $region3: #{tpu_custom_call.1} parent=1 // loop_header
      %s21 = sphi 0, %s25
      %p22 = scmp.ge.s32.totalorder %s21, 4
      %s28 = sphi 0, %s47
      %s29 = sphi 0, %s43
      %s30 = sphi 0, %s39
      %s31 = sphi 0, %s28
      %s32 = sphi 0, %s29
      %s33 = sphi 0, %s30
      %s34 = sphi 0, %s31
      %s35 = sphi 0, %s32
      %s36 = sphi 0, %s33
      %s48 = sphi 0, %s48
      %s50 = sphi 0, %s48
      %s51 = sphi 0, %s50
      %s65 = sphi 0, %s51
      %s73 = sphi 0, %s75
      %s76 = sphi 0, %s73
      %s77 = sphi 0, %s76
      %s93 = sphi 0, %s77
      %s101 = sphi 0, %s103
      %s104 = sphi 0, %s101
      %s105 = sphi 0, %s104
      %s121 = sphi 0, %s105
      %s131 = sphi 0, %s133
      %s134 = sphi 0, %s131
      %s135 = sphi 0, %s134
      %s151 = sphi 0, %s135
      %s159 = sphi 0, %s161
      %s162 = sphi 0, %s159
      %s163 = sphi 0, %s162
      %s179 = sphi 0, %s163
    $region4: #{tpu_custom_call.1} parent=1 // loop_header_branch
      %24 = sbr.rel (%p22) target = $region8
    $region5: #{tpu_custom_call.1} parent=1 // loop_body
      %s26 = ssub.s32 %s21, 1
      %s27 = ssub.s32 %s21, 2
      %s37 = sadd.s32 1, %s30
      %p38 = scmp.ge.s32.totalorder %s37, 1
      %s39 = scalar_select %p38, 0, %s37
      %s40 = sadd.s32 1, %s29
      %s41 = scalar_select %p38, %s40, %s29
      %p42 = scmp.ge.s32.totalorder %s41, 1
      %s43 = scalar_select %p42, 0, %s41
      %s44 = sadd.s32 1, %s28
      %s45 = scalar_select %p42, %s44, %s28
      %p46 = scmp.ge.s32.totalorder %s45, 2
      %s47 = scalar_select %p46, 0, %s45
      %s49 = sadd.s32 %s48, 1
      %p52 = scmp.eq.s32.totalorder %s21, 1
      %p53 = scmp.ne.s32.totalorder %s48, %s50
      %p54 = scmp.eq.s32.totalorder %s21, 0
      %p55 = por %p53, %p54
      %p56 = scmp.ne.s32.totalorder %s48, %s50
      %p57 = scmp.eq.s32.totalorder %s26, 1
      %p58 = por %p56, %p57
      %p59 = scmp.ne.s32.totalorder %s50, %s51
      %p60 = scmp.eq.s32.totalorder %s26, 0
      %p61 = por %p59, %p60
      %p62 = scmp.ne.s32.totalorder %s50, %s51
      %p63 = scmp.eq.s32.totalorder %s27, 1
      %p64 = por %p62, %p63
      %p66 = scmp.ne.s32.totalorder %s51, %s65
      %p67 = scmp.eq.s32.totalorder %s27, 0
      %p68 = por %p66, %p67
      %s69 = ssub.s32 %s28, %s47
      %s70 = ssub.s32 %s29, %s43
      %s71 = sor.u32 %s69, %s70
      %p72 = scmp.eq.s32.totalorder %s71, 0
      %s74 = sadd.s32 %s73, 1
      %s75 = scalar_select %p72, %s73, %s74
      %p78 = pneg %p72
      %p79 = scmp.eq.s32.totalorder %s21, 1
      %p80 = por %p78, %p79
      %p81 = scmp.ne.s32.totalorder %s73, %s76
      %p82 = scmp.eq.s32.totalorder %s21, 0
      %p83 = por %p81, %p82
      %p84 = scmp.ne.s32.totalorder %s73, %s76
      %p85 = scmp.eq.s32.totalorder %s26, 1
      %p86 = por %p84, %p85
      %p87 = scmp.ne.s32.totalorder %s76, %s77
      %p88 = scmp.eq.s32.totalorder %s26, 0
      %p89 = por %p87, %p88
      %p90 = scmp.ne.s32.totalorder %s76, %s77
      %p91 = scmp.eq.s32.totalorder %s27, 1
      %p92 = por %p90, %p91
      %p94 = scmp.ne.s32.totalorder %s77, %s93
      %p95 = scmp.eq.s32.totalorder %s27, 0
      %p96 = por %p94, %p95
      %s97 = ssub.s32 %s28, %s47
      %s98 = ssub.s32 %s30, %s39
      %s99 = sor.u32 %s97, %s98
      %p100 = scmp.eq.s32.totalorder %s99, 0
      %s102 = sadd.s32 %s101, 1
      %s103 = scalar_select %p100, %s101, %s102
      %p106 = pneg %p100
      %p107 = scmp.eq.s32.totalorder %s21, 1
      %p108 = por %p106, %p107
      %p109 = scmp.ne.s32.totalorder %s101, %s104
      %p110 = scmp.eq.s32.totalorder %s21, 0
      %p111 = por %p109, %p110
      %p112 = scmp.ne.s32.totalorder %s101, %s104
      %p113 = scmp.eq.s32.totalorder %s26, 1
      %p114 = por %p112, %p113
      %p115 = scmp.ne.s32.totalorder %s104, %s105
      %p116 = scmp.eq.s32.totalorder %s26, 0
      %p117 = por %p115, %p116
      %p118 = scmp.ne.s32.totalorder %s104, %s105
      %p119 = scmp.eq.s32.totalorder %s27, 1
      %p120 = por %p118, %p119
      %p122 = scmp.ne.s32.totalorder %s105, %s121
      %p123 = scmp.eq.s32.totalorder %s27, 0
      %p124 = por %p122, %p123
      %s125 = ssub.s32 %s28, %s47
      %s126 = ssub.s32 %s29, %s43
      %s127 = sor.u32 %s125, %s126
      %s128 = ssub.s32 %s30, %s39
      %s129 = sor.u32 %s127, %s128
      %p130 = scmp.eq.s32.totalorder %s129, 0
      %s132 = sadd.s32 %s131, 1
      %s133 = scalar_select %p130, %s131, %s132
      %p136 = pneg %p130
      %p137 = scmp.eq.s32.totalorder %s21, 1
      %p138 = por %p136, %p137
      %p139 = scmp.ne.s32.totalorder %s131, %s134
      %p140 = scmp.eq.s32.totalorder %s21, 0
      %p141 = por %p139, %p140
      %p142 = scmp.ne.s32.totalorder %s131, %s134
      %p143 = scmp.eq.s32.totalorder %s26, 1
      %p144 = por %p142, %p143
      %p145 = scmp.ne.s32.totalorder %s134, %s135
      %p146 = scmp.eq.s32.totalorder %s26, 0
      %p147 = por %p145, %p146
      %p148 = scmp.ne.s32.totalorder %s134, %s135
      %p149 = scmp.eq.s32.totalorder %s27, 1
      %p150 = por %p148, %p149
      %p152 = scmp.ne.s32.totalorder %s135, %s151
      %p153 = scmp.eq.s32.totalorder %s27, 0
      %p154 = por %p152, %p153
      %s155 = ssub.s32 %s28, %s47
      %s156 = ssub.s32 %s29, %s43
      %s157 = sor.u32 %s155, %s156
      %p158 = scmp.eq.s32.totalorder %s157, 0
      %s160 = sadd.s32 %s159, 1
      %s161 = scalar_select %p158, %s159, %s160
      %p164 = pneg %p158
      %p165 = scmp.eq.s32.totalorder %s21, 1
      %p166 = por %p164, %p165
      %p167 = scmp.ne.s32.totalorder %s159, %s162
      %p168 = scmp.eq.s32.totalorder %s21, 0
      %p169 = por %p167, %p168
      %p170 = scmp.ne.s32.totalorder %s159, %s162
      %p171 = scmp.eq.s32.totalorder %s26, 1
      %p172 = por %p170, %p171
      %p173 = scmp.ne.s32.totalorder %s162, %s163
      %p174 = scmp.eq.s32.totalorder %s26, 0
      %p175 = por %p173, %p174
      %p176 = scmp.ne.s32.totalorder %s162, %s163
      %p177 = scmp.eq.s32.totalorder %s27, 1
      %p178 = por %p176, %p177
      %p180 = scmp.ne.s32.totalorder %s163, %s179
      %p181 = scmp.eq.s32.totalorder %s27, 0
      %p182 = por %p180, %p181
      %p183 = scmp.le.s32.totalorder 1, %s21
      %p184 = scmp.lt.s32.totalorder %s21, 3
      %p185 = pnand %p183, %p184
      %p186 = pneg %p185
      // Predicated region
      $region9: #{tpu_custom_call.1} parent=5 // pred_check
        _
      $region10: #{tpu_custom_call.1} parent=5 // pred_check_branch
        %188 = sbr.rel (%p185) target = $region12
      $region11: #{tpu_custom_call.1} parent=5 // pred_region
        %s189 = ssub.s32 %s21, 1
        // Predicated region
        $region13: #{tpu_custom_call.1} parent=11 // pred_check
          %p190 = pneg %p61
        $region14: #{tpu_custom_call.1} parent=11 // pred_check_branch
          %192 = sbr.rel (%p190) target = $region16
        $region15: #{tpu_custom_call.1} parent=11 // pred_region
          _
        $region16: #{tpu_custom_call.1} parent=11 // pred_fallthru
          _
      $region12: #{tpu_custom_call.1} parent=5 // pred_fallthru
        _
      %p193 = scmp.lt.s32.totalorder %s21, 2
      // Predicated region
      $region17: #{tpu_custom_call.1} parent=5 // pred_check
        %p194 = pneg %p193
      $region18: #{tpu_custom_call.1} parent=5 // pred_check_branch
        %196 = sbr.rel (%p194) target = $region20
      $region19: #{tpu_custom_call.1} parent=5 // pred_region
        // Predicated region
        $region21: #{tpu_custom_call.1} parent=19 // pred_check
          %p197 = pneg %p83
        $region22: #{tpu_custom_call.1} parent=19 // pred_check_branch
          %199 = sbr.rel (%p197) target = $region24
        $region23: #{tpu_custom_call.1} parent=19 // pred_region
          %s200 = sand.u32 %s73, 1
          %s201 = scalar_lea.sflag [#allocation7], %s200
          %s202 = sand.u32 %s73, 1
          %s203 = smul.addr %s202, 4
          %s204 = scalar_lea.vmem [#allocation6], %s203
          %s206 = ssub.s32 64, 64
          %207 = vsyncadd %s201, %s206
          %s208 = sadd.s32 %s29, %s28
          %s209 = smul.addr %s208, 64
          %s210 = scalar_lea.hbm %s1, %s209
          %s212 = sshll.u32 %s204, 4
          %s213 = int_to_ptr.vmem [resolvable:$true] %s212
          %215 = dma.hbm_to_vmem [thread:$0]  %s210, 64, %s213, %s201
        $region24: #{tpu_custom_call.1} parent=19 // pred_fallthru
          _
        // Predicated region
        $region25: #{tpu_custom_call.1} parent=19 // pred_check
          %p216 = pneg %p111
        $region26: #{tpu_custom_call.1} parent=19 // pred_check_branch
          %218 = sbr.rel (%p216) target = $region28
        $region27: #{tpu_custom_call.1} parent=19 // pred_region
          %s219 = sand.u32 %s101, 1
          %s220 = scalar_lea.sflag [#allocation10], %s219
          %s221 = sand.u32 %s101, 1
          %s222 = smul.addr %s221, 128
          %s223 = scalar_lea.vmem [#allocation9], %s222
          %s224 = smul.u32 32, %s30
          %s226 = ssub.s32 2048, 2048
          %227 = vsyncadd %s220, %s226
          %s228 = smul.addr %s28, 32
          %s229 = sadd.s32 %s224, %s228
          %s230 = smul.addr %s229, 64
          %s231 = scalar_lea.hbm %s2, %s230
          %s232 = sshll.u32 %s223, 4
          %s233 = int_to_ptr.vmem [resolvable:$true] %s232
          %238 = dma.hbm_to_vmem [thread:$0]  %s231, 2048, %s233, %s220, 64, 64, 4
        $region28: #{tpu_custom_call.1} parent=19 // pred_fallthru
          _
      $region20: #{tpu_custom_call.1} parent=5 // pred_fallthru
        _
      %p239 = scmp.le.s32.totalorder 1, %s21
      %p240 = scmp.lt.s32.totalorder %s21, 3
      %p241 = pnand %p239, %p240
      %p242 = pneg %p241
      // Predicated region
      $region29: #{tpu_custom_call.1} parent=5 // pred_check
        _
      $region30: #{tpu_custom_call.1} parent=5 // pred_check_branch
        %244 = sbr.rel (%p241) target = $region32
      $region31: #{tpu_custom_call.1} parent=5 // pred_region
        %s245 = ssub.s32 %s21, 1
        %s246 = sand.u32 %s76, 1
        %s247 = scalar_lea.sflag [#allocation7], %s246
        %s248 = sand.u32 %s76, 1
        %s249 = smul.addr %s248, 4
        %s250 = scalar_lea.vmem [#allocation6], %s249
        // Predicated region
        $region33: #{tpu_custom_call.1} parent=31 // pred_check
          %p251 = pneg %p89
        $region34: #{tpu_custom_call.1} parent=31 // pred_check_branch
          %253 = sbr.rel (%p251) target = $region36
        $region35: #{tpu_custom_call.1} parent=31 // pred_region
          %254 = dma.done %s247, 64
        $region36: #{tpu_custom_call.1} parent=31 // pred_fallthru
          _
        %s255 = sand.u32 %s104, 1
        %s256 = scalar_lea.sflag [#allocation10], %s255
        %s257 = sand.u32 %s104, 1
        %s258 = smul.addr %s257, 128
        %s259 = scalar_lea.vmem [#allocation9], %s258
        // Predicated region
        $region37: #{tpu_custom_call.1} parent=31 // pred_check
          %p260 = pneg %p117
        $region38: #{tpu_custom_call.1} parent=31 // pred_check_branch
          %262 = sbr.rel (%p260) target = $region40
        $region39: #{tpu_custom_call.1} parent=31 // pred_region
          %263 = dma.done %s256, 2048
        $region40: #{tpu_custom_call.1} parent=31 // pred_fallthru
          _
        %p264 = pneg %p61
        %p265 = pneg %p58
        %s266 = sand.u32 %s76, 1
        %s267 = scalar_lea.sflag [#allocation7], %s266
        %s268 = sand.u32 %s76, 1
        %s269 = smul.addr %s268, 4
        %s270 = scalar_lea.vmem [#allocation6], %s269
        %p271 = pneg %p89
        %p272 = pneg %p86
        %s273 = sand.u32 %s104, 1
        %s274 = scalar_lea.sflag [#allocation10], %s273
        %s275 = sand.u32 %s104, 1
        %s276 = smul.addr %s275, 128
        %s277 = scalar_lea.vmem [#allocation9], %s276
        %p278 = pneg %p117
        %p279 = pneg %p114
        %p280 = pneg %p147
        %p281 = pneg %p144
        %s282 = sand.u32 %s134, 1
        %s283 = scalar_lea.sflag [#allocation8], %s282
        %s284 = sand.u32 %s134, 1
        %s285 = smul.addr %s284, 16
        %s286 = scalar_lea.vmem [#allocation11], %s285
        %p287 = pneg %p175
        %p288 = pneg %p172
        %p289 = scmp.lt.s32.totalorder %s31, 1
        %s290 = scalar_select %p289, %s31, 1
        %p291 = scmp.lt.s32.totalorder %s32, 0
        %s292 = scalar_select %p291, %s32, 0
        %s293 = sadd.s32 %s292, %s290
        %s294 = smul.addr %s293, 8
        %s295 = scalar_lea.vmem %s4, %s294
        %s296 = smul.u32 32, %s33
        %s297 = smul.u32 2, %s33
        %p298 = scmp.lt.s32.totalorder %s31, 1
        %s299 = scalar_select %p298, %s31, 1
        %p300 = scmp.lt.s32.totalorder %s32, 0
        %s301 = scalar_select %p300, %s32, 0
        %s302 = sadd.s32 %s301, %s299
        %s303 = smul.addr %s302, 8
        %s304 = scalar_lea.vmem %s4, %s303
        %p306 = scmp.eq.s32.totalorder %s33, 0
        // Predicated region
        $region41: #{tpu_custom_call.1} parent=31 // pred_check
          %p307 = pneg %p306
        $region42: #{tpu_custom_call.1} parent=31 // pred_check_branch
          %309 = sbr.rel (%p307) target = $region44
        $region43: #{tpu_custom_call.1} parent=31 // pred_region
          %vm310 = vcmask 7168
          %311 = vst.msk [vmem:[#allocation2] sm:$0xff] %vm310, -inf
          %312 = vst.msk [vmem:[#allocation3] sm:$0xff] %vm310, 0.0
          %313 = vst.msk [vmem:[#allocation4] sm:$0xff] %vm310, 0.0
        $region44: #{tpu_custom_call.1} parent=31 // pred_fallthru
          _
        %v314 = vld [vmem:[%s250] sm:$0xf]
        %v315 = vld [vmem:[%s259] sm:$0xf]
        %v316 = vld [vmem:[%s259 + $0x4] sm:$0xf]
        %v317 = vld [vmem:[%s259 + $0x8] sm:$0xf]
        %v318 = vld [vmem:[%s259 + $0xc] sm:$0xf]
        %v319 = vld [vmem:[%s259 + $0x10] sm:$0xf]
        %v320 = vld [vmem:[%s259 + $0x14] sm:$0xf]
        %v321 = vld [vmem:[%s259 + $0x18] sm:$0xf]
        %v322 = vld [vmem:[%s259 + $0x1c] sm:$0xf]
        %v323 = vld [vmem:[%s259 + $0x20] sm:$0xf]
        %v324 = vld [vmem:[%s259 + $0x24] sm:$0xf]
        %v325 = vld [vmem:[%s259 + $0x28] sm:$0xf]
        %v326 = vld [vmem:[%s259 + $0x2c] sm:$0xf]
        %v327 = vld [vmem:[%s259 + $0x30] sm:$0xf]
        %v328 = vld [vmem:[%s259 + $0x34] sm:$0xf]
        %v329 = vld [vmem:[%s259 + $0x38] sm:$0xf]
        %v330 = vld [vmem:[%s259 + $0x3c] sm:$0xf]
        %v331 = vld [vmem:[%s259 + $0x40] sm:$0xf]
        %v332 = vld [vmem:[%s259 + $0x44] sm:$0xf]
        %v333 = vld [vmem:[%s259 + $0x48] sm:$0xf]
        %v334 = vld [vmem:[%s259 + $0x4c] sm:$0xf]
        %v335 = vld [vmem:[%s259 + $0x50] sm:$0xf]
        %v336 = vld [vmem:[%s259 + $0x54] sm:$0xf]
        %v337 = vld [vmem:[%s259 + $0x58] sm:$0xf]
        %v338 = vld [vmem:[%s259 + $0x5c] sm:$0xf]
        %v339 = vld [vmem:[%s259 + $0x60] sm:$0xf]
        %v340 = vld [vmem:[%s259 + $0x64] sm:$0xf]
        %v341 = vld [vmem:[%s259 + $0x68] sm:$0xf]
        %v342 = vld [vmem:[%s259 + $0x6c] sm:$0xf]
        %v343 = vld [vmem:[%s259 + $0x70] sm:$0xf]
        %v344 = vld [vmem:[%s259 + $0x74] sm:$0xf]
        %v345 = vld [vmem:[%s259 + $0x78] sm:$0xf]
        %v346 = vld [vmem:[%s259 + $0x7c] sm:$0xf]
        %v379 = vunpack.c.l.b16 %v315
        %v380 = vunpack.c.l.b16 %v316
        %v381 = vunpack.c.l.b16 %v317
        %v382 = vunpack.c.l.b16 %v318
        %v383 = vunpack.c.l.b16 %v319
        %v384 = vunpack.c.l.b16 %v320
        %v385 = vunpack.c.l.b16 %v321
        %v386 = vunpack.c.l.b16 %v322
        %v387 = vunpack.c.l.b16 %v323
        %v388 = vunpack.c.l.b16 %v324
        %v389 = vunpack.c.l.b16 %v325
        %v390 = vunpack.c.l.b16 %v326
        %v391 = vunpack.c.l.b16 %v327
        %v392 = vunpack.c.l.b16 %v328
        %v393 = vunpack.c.l.b16 %v329
        %v394 = vunpack.c.l.b16 %v330
        %v395 = vunpack.c.l.b16 %v331
        %v396 = vunpack.c.l.b16 %v332
        %v397 = vunpack.c.l.b16 %v333
        %v398 = vunpack.c.l.b16 %v334
        %v399 = vunpack.c.l.b16 %v335
        %v400 = vunpack.c.l.b16 %v336
        %v401 = vunpack.c.l.b16 %v337
        %v402 = vunpack.c.l.b16 %v338
        %v403 = vunpack.c.l.b16 %v339
        %v404 = vunpack.c.l.b16 %v340
        %v405 = vunpack.c.l.b16 %v341
        %v406 = vunpack.c.l.b16 %v342
        %v407 = vunpack.c.l.b16 %v343
        %v408 = vunpack.c.l.b16 %v344
        %v409 = vunpack.c.l.b16 %v345
        %v410 = vunpack.c.l.b16 %v346
        %v411 = vpack.c.b16 %v380, %v379
        %v412 = vpack.c.b16 %v382, %v381
        %v413 = vpack.c.b16 %v384, %v383
        %v414 = vpack.c.b16 %v386, %v385
        %v415 = vpack.c.b16 %v388, %v387
        %v416 = vpack.c.b16 %v390, %v389
        %v417 = vpack.c.b16 %v392, %v391
        %v418 = vpack.c.b16 %v394, %v393
        %v419 = vpack.c.b16 %v396, %v395
        %v420 = vpack.c.b16 %v398, %v397
        %v421 = vpack.c.b16 %v400, %v399
        %v422 = vpack.c.b16 %v402, %v401
        %v423 = vpack.c.b16 %v404, %v403
        %v424 = vpack.c.b16 %v406, %v405
        %v425 = vpack.c.b16 %v408, %v407
        %v426 = vpack.c.b16 %v410, %v409
        %443 = vmatprep.subr.bf16.mxu0 0
        %444 = vmatpush1.bf16.xpose.msra.mxu0 %v411
        %445 = vmatprep.subr.bf16.mxu0 0
        %446 = vmatpush1.bf16.xpose.msra.mxu0 %v412
        %447 = vmatprep.subr.bf16.mxu0 0
        %448 = vmatpush1.bf16.xpose.msra.mxu0 %v413
        %449 = vmatprep.subr.bf16.mxu0 0
        %450 = vmatpush1.bf16.xpose.msra.mxu0 %v414
        %451 = vmatprep.subr.bf16.mxu0 0
        %452 = vmatpush1.bf16.xpose.msra.mxu0 %v415
        %453 = vmatprep.subr.bf16.mxu0 0
        %454 = vmatpush1.bf16.xpose.msra.mxu0 %v416
        %455 = vmatprep.subr.bf16.mxu0 0
        %456 = vmatpush1.bf16.xpose.msra.mxu0 %v417
        %457 = vmatprep.subr.bf16.mxu0 0
        %458 = vmatpush1.bf16.xpose.msra.mxu0 %v418
        %459 = vmatprep.subr.bf16.mxu0 0
        %460 = vmatpush1.bf16.xpose.msra.mxu0 %v419
        %461 = vmatprep.subr.bf16.mxu0 0
        %462 = vmatpush1.bf16.xpose.msra.mxu0 %v420
        %463 = vmatprep.subr.bf16.mxu0 0
        %464 = vmatpush1.bf16.xpose.msra.mxu0 %v421
        %465 = vmatprep.subr.bf16.mxu0 0
        %466 = vmatpush1.bf16.xpose.msra.mxu0 %v422
        %467 = vmatprep.subr.bf16.mxu0 0
        %468 = vmatpush1.bf16.xpose.msra.mxu0 %v423
        %469 = vmatprep.subr.bf16.mxu0 0
        %470 = vmatpush1.bf16.xpose.msra.mxu0 %v424
        %471 = vmatprep.subr.bf16.mxu0 0
        %472 = vmatpush1.bf16.xpose.msra.mxu0 %v425
        %473 = vmatprep.subr.bf16.mxu0 0
        %474 = vmatpush1.bf16.xpose.msra.mxu0 %v426
        %475 = vmatprep.mubr.bf16.mxu0 0
        %476 = vmatmul.mubr.bf16.gmra.mrb[0].mxu0 %v314
        %v477 = vpop.f32.mrb[0].mxu0
        %v478 = vadd.f32 0.0, %v477
        %v479 = vpop.f32.mrb[0].mxu0
        %v480 = vadd.f32 0.0, %v479
        %v481 = vpop.f32.mrb[0].mxu0
        %v482 = vpop.f32.mrb[0].mxu0
        %483 = vdwg.mxu0
        %s484 = sld [smem:[#allocation5]]
        %v485 = vstv %s484
        %v486 = vmul.f32 %v485, %v478
        %v487 = vmul.f32 %v485, %v480
        %488 = vst [vmem:[%s286] sm:$0xff] %v486
        %489 = vst [vmem:[%s286 + $0x8] sm:$0xff] %v487
        %s490 = smul.u32 %s32, 8
        %s491 = smul.u32 %s33, 256
        %s492 = sadd.s32 %s491, 256
        %p493 = scmp.lt.s32.totalorder %s490, %s492
        %s494 = sadd.s32 %s490, 8
        %p495 = scmp.lt.s32.totalorder %s491, %s494
        %p496 = pnand %p493, %p495
        %p497 = pneg %p496
        // Predicated region
        $region45: #{tpu_custom_call.1} parent=31 // pred_check
          _
        $region46: #{tpu_custom_call.1} parent=31 // pred_check_branch
          %499 = sbr.rel (%p496) target = $region48
        $region47: #{tpu_custom_call.1} parent=31 // pred_region
          %v500 = vlaneseq
          %v501 = vand.u32 %v500, 127
          %v502 = vadd.s32 %v501, 128
          %s503 = ssub.s32 %s490, %s491
          %v504 = vlaneseq
          %v505 = vshrl.u32 %v504, 7
          %v506 = vstv %s503
          %v507 = vadd.s32 %v506, %v505
          %v508 = vld [vmem:[#allocation4] sm:$0xff]
          %vm509 = vcmp.eq.s32.totalorder %v501, %v507
          %vm510 = vcmp.eq.s32.totalorder %v502, %v507
          %v511 = vsel %vm509, %v486, 0.0
          %v512 = vsel %vm510, %v487, 0.0
          %v513 = vadd.f32 %v511, %v512
          %514 = vadd.xlane.f32.xlu0 %v513
          %v515 = vpop.xlane.xlu0 %514
          %v516 = vadd.f32 %v508, %v515
          %vm517 = vcmask 7168
          %518 = vst.msk [vmem:[#allocation4] sm:$0xff] %vm517, %v516
        $region48: #{tpu_custom_call.1} parent=31 // pred_fallthru
          _
        %v519 = vld [vmem:[#allocation2] sm:$0xff]
        %v520 = vmax.f32 %v486, %v487
        %521 = vmax.xlane.f32.xlu0 %v520
        %v522 = vpop.xlane.xlu0 %521
        %v523 = vmax.f32 %v519, %v522
        %525 = vset.pattern.permute.xlu0 0
        %526 = vperm.xlu0 %525, %v523
        %v527 = vpop.permute.xlu0 %526
        %v529 = vsub.f32 %v486, %v527
        %v530 = vsub.f32 %v487, %v527
        %v531 = vpack.c.bf16 %v529, %v529
        %v532 = vpack.c.bf16 %v530, %v530
        %v534 = vmul.bf16 %v531, 1069105081
        %v535 = vpow.bf16.pop %v534
        %v537 = vmul.bf16 %v532, 1069105081
        %v538 = vpow.bf16.pop %v537
        %v539 = vunpack.c.l.bf16 %v535
        %v540 = vunpack.c.l.bf16 %v538
        %v541 = vld [vmem:[#allocation3] sm:$0xff]
        %v542 = vsub.f32 %v519, %v523
        %v543 = vmul.f32 %v542, 1.442695
        %v544 = vpow.pop %v543
        %v545 = vmul.f32 %v541, %v544
        %v546 = vadd.f32 %v539, %v540
        %547 = vadd.xlane.f32.xlu0 %v546
        %v548 = vpop.xlane.xlu0 %547
        %v549 = vadd.f32 %v545, %v548
        %vm550 = vcmask 7168
        %551 = vst.msk [vmem:[#allocation3] sm:$0xff] %vm550, %v549
        %552 = vst.msk [vmem:[#allocation2] sm:$0xff] %vm550, %v523
        // Predicated region
        $region49: #{tpu_custom_call.1} parent=31 // pred_check
          %p553 = pneg %p306
        $region50: #{tpu_custom_call.1} parent=31 // pred_check_branch
          %555 = sbr.rel (%p553) target = $region52
        $region51: #{tpu_custom_call.1} parent=31 // pred_region
          %v556 = vld [vmem:[#allocation2] sm:$0xff]
          %v557 = vld [vmem:[#allocation3] sm:$0xff]
          %v558 = vlog2.pop %v557
          %v559 = vmul.f32 %v558, 0.6931472
          %v560 = vadd.f32 %v556, %v559
          %v561 = vld [vmem:[#allocation4] sm:$0xff]
          %v562 = vsub.f32 %v560, %v561
          %563 = vst.msk [vmem:[%s304] sm:$0xff] %vm550, %v562
        $region52: #{tpu_custom_call.1} parent=31 // pred_fallthru
          _
        %s564 = sand.u32 %s134, 1
        %s565 = scalar_lea.sflag [#allocation8], %s564
        %s566 = sand.u32 %s134, 1
        %s567 = smul.addr %s566, 16
        %s568 = scalar_lea.vmem [#allocation11], %s567
        %p569 = scmp.lt.s32.totalorder %s31, 1
        %s570 = scalar_select %p569, %s31, 1
        %p571 = scmp.lt.s32.totalorder %s32, 0
        %s572 = scalar_select %p571, %s32, 0
        %s573 = sadd.s32 %s572, %s570
        %s574 = smul.addr %s573, 8
        %s575 = scalar_lea.vmem %s4, %s574
        // Predicated region
        $region53: #{tpu_custom_call.1} parent=31 // pred_check
          %p576 = pneg %p144
        $region54: #{tpu_custom_call.1} parent=31 // pred_check_branch
          %578 = sbr.rel (%p576) target = $region56
        $region55: #{tpu_custom_call.1} parent=31 // pred_region
          %s579 = smul.u32 2, %s33
          %s581 = ssub.s32 256, 256
          %582 = vsyncadd %s565, %s581
          %s583 = smul.addr %s32, 2
          %s584 = sadd.s32 %s579, %s583
          %s585 = smul.addr %s31, 2
          %s586 = sadd.s32 %s584, %s585
          %s587 = smul.addr %s586, 128
          %s588 = scalar_lea.hbm %s3, %s587
          %s590 = sshll.u32 %s568, 4
          %s591 = int_to_ptr.vmem [resolvable:$true] %s590
          %593 = dma.vmem_to_hbm [thread:$0]  %s591, 256, %s588, %s565
        $region56: #{tpu_custom_call.1} parent=31 // pred_fallthru
          _
        // Predicated region
        $region57: #{tpu_custom_call.1} parent=31 // pred_check
          %p594 = pneg %p172
        $region58: #{tpu_custom_call.1} parent=31 // pred_check_branch
          %596 = sbr.rel (%p594) target = $region60
        $region59: #{tpu_custom_call.1} parent=31 // pred_region
          _
        $region60: #{tpu_custom_call.1} parent=31 // pred_fallthru
          _
      $region32: #{tpu_custom_call.1} parent=5 // pred_fallthru
        _
      %p597 = scmp.le.s32.totalorder 2, %s21
      // Predicated region
      $region61: #{tpu_custom_call.1} parent=5 // pred_check
        %p598 = pneg %p597
      $region62: #{tpu_custom_call.1} parent=5 // pred_check_branch
        %600 = sbr.rel (%p598) target = $region64
      $region63: #{tpu_custom_call.1} parent=5 // pred_region
        %s601 = ssub.s32 %s21, 2
        // Predicated region
        $region65: #{tpu_custom_call.1} parent=63 // pred_check
          %p602 = pneg %p150
        $region66: #{tpu_custom_call.1} parent=63 // pred_check_branch
          %604 = sbr.rel (%p602) target = $region68
        $region67: #{tpu_custom_call.1} parent=63 // pred_region
          %s605 = sand.u32 %s135, 1
          %s606 = scalar_lea.sflag [#allocation8], %s605
          %s607 = sand.u32 %s135, 1
          %s608 = smul.addr %s607, 16
          %s609 = scalar_lea.vmem [#allocation11], %s608
          %610 = dma.done %s606, 256
        $region68: #{tpu_custom_call.1} parent=63 // pred_fallthru
          _
        // Predicated region
        $region69: #{tpu_custom_call.1} parent=63 // pred_check
          %p611 = pneg %p178
        $region70: #{tpu_custom_call.1} parent=63 // pred_check_branch
          %613 = sbr.rel (%p611) target = $region72
        $region71: #{tpu_custom_call.1} parent=63 // pred_region
          %p614 = scmp.lt.s32.totalorder %s34, 1
          %s615 = scalar_select %p614, %s34, 1
          %p616 = scmp.lt.s32.totalorder %s35, 0
          %s617 = scalar_select %p616, %s35, 0
          %s618 = sadd.s32 %s617, %s615
          %s619 = smul.addr %s618, 8
          %s620 = scalar_lea.vmem %s4, %s619
        $region72: #{tpu_custom_call.1} parent=63 // pred_fallthru
          _
      $region64: #{tpu_custom_call.1} parent=5 // pred_fallthru
        _
    $region6: #{tpu_custom_call.1} parent=1 // loop_footer
      %s25 = sadd.s32 1, %s21
    $region7: #{tpu_custom_call.1} parent=1 // loop_footer_branch
      %20 = sbr.rel target = $region3
    $region8: #{tpu_custom_call.1} parent=1 // loop_exit
      _
    %621 = vsyncpa [#allocation7], 1
    %s622 = scalar_lea.sflag [#allocation7], 1
    %623 = vsyncpa %s622, 1
    %624 = vsyncpa [#allocation10], 1
    %s625 = scalar_lea.sflag [#allocation10], 1
    %626 = vsyncpa %s625, 1
    %627 = vsyncpa [#allocation8], 1
    %s628 = scalar_lea.sflag [#allocation8], 1
    %629 = vsyncpa %s628, 1

</llo_original>
